<compile_context>
chip_gen: v5e
topology: v5e:2x2
jax: 0.10.0
libtpu: 0.0.40
codegen_flags: <defaults>
</compile_context>

<pallas_src>
import functools
import math

import jax
import jax.numpy as jnp
from jax.experimental import pallas as pl
from jax.experimental.pallas import tpu as pltpu


_LANES = 128
_SUBLANES = 8
_VREG_ELEMS = _SUBLANES * _LANES            # 1024
_BLOCK_ROWS = 512                           # tiled-fallback block: (512, 128)
_SINGLE_BLOCK_MAX_ELEMS = 2 * 1024 * 1024   # ~8 MiB f32 in + out; safe on v5e/v6e/v7x


# ----------------------------- Pallas kernel ------------------------------ #
def _softplus_kernel(b_ref, o_ref, *, eps, compute_dtype):
    b = b_ref[...]
    if b.dtype != compute_dtype:
        b = b.astype(compute_dtype)
    # Numerically-stable softplus matching torch.nn.functional.softplus
    # (beta=1, threshold=20): x > 20 -> x, else log1p(exp(x)).
    thr = jnp.asarray(20.0, compute_dtype)
    safe = jnp.minimum(b, thr)
    sp = jnp.where(b > thr, b, jnp.log1p(jnp.exp(safe)))
    out = sp + eps
    if out.dtype != o_ref.dtype:
        out = out.astype(o_ref.dtype)
    o_ref[...] = out


def _compute_dtype_for(param_dtype):
    """f32 params compute in f32. Sub-32-bit params: upcast only on pre-v6e
    chips (their EUP has no bf16 exp/log path); v6e/v7x stay native."""
    if param_dtype == jnp.float32:
        return jnp.float32
    try:
        kind = jax.devices()[0].device_kind.lower()
    except Exception:  # pragma: no cover - no device info -> be conservative
        return jnp.float32
    needs_f32 = any(g in kind for g in ("v2", "v3", "v4", "v5"))
    return jnp.float32 if needs_f32 else param_dtype


# ------------------------------- wrapper ----------------------------------- #
@functools.partial(jax.jit, static_argnames=("eps",))
def _variance_encoder_core(b, *, eps):
    b_shape = b.shape
    n = b.size
    dtype = b.dtype
    itemsize = jnp.dtype(dtype).itemsize

    # Lane- and sublane-dense slab: flatten, zero-pad to a multiple of 1024
    # elements, view as (8*k, 128) -> full vreg tiles, unmasked vld/vst.
    padded = max(1, pl.cdiv(n, _VREG_ELEMS)) * _VREG_ELEMS
    tiled = padded > _SINGLE_BLOCK_MAX_ELEMS
    if tiled:
        # Round rows up to a multiple of the block height for the grid path.
        padded = pl.cdiv(padded, _BLOCK_ROWS * _LANES) * (_BLOCK_ROWS * _LANES)
    rows = padded // _LANES

    b_flat = b.reshape(-1)
    if padded != n:
        b_flat = jnp.pad(b_flat, (0, padded - n))
    b2d = b_flat.reshape(rows, _LANES)

    kernel = functools.partial(
        _softplus_kernel, eps=eps, compute_dtype=_compute_dtype_for(dtype))
    cost = pl.CostEstimate(
        flops=3 * padded,
        transcendentals=2 * padded,
        bytes_accessed=2 * padded * itemsize)

    if not tiled:
        # Grid-less: the whole parameter is a single VMEM block.
        out2d = pl.pallas_call(
            kernel,
            out_shape=jax.ShapeDtypeStruct(b2d.shape, dtype),
            in_specs=[pl.BlockSpec(memory_space=pltpu.MemorySpace.VMEM)],
            out_specs=pl.BlockSpec(memory_space=pltpu.MemorySpace.VMEM),
            cost_estimate=cost,
        )(b2d)
    else:
        # Tiled fallback for huge flattened shapes (channelwise=False etc.).
        out2d = pl.pallas_call(
            kernel,
            out_shape=jax.ShapeDtypeStruct(b2d.shape, dtype),
            grid=(rows // _BLOCK_ROWS,),
            in_specs=[pl.BlockSpec((_BLOCK_ROWS, _LANES), lambda i: (i, 0))],
            out_specs=pl.BlockSpec((_BLOCK_ROWS, _LANES), lambda i: (i, 0)),
            compiler_params=pltpu.CompilerParams(
                dimension_semantics=("parallel",)),
            cost_estimate=cost,
        )(b2d)

    return out2d.reshape(-1)[:n].reshape(b_shape)


def variance_encoder_forward(x, b, *, eps=1e-5):
    """softplus(b) + eps.  `x` is accepted (to mirror the nn.Module signature)
    but unused, exactly as in the reference PyTorch forward."""
    del x  # unused by the reference forward
    return _variance_encoder_core(b, eps=float(eps))


# ------------------------- parameter construction ------------------------- #
def make_variance_encoder_params(shape, init=0.1, channelwise=True, eps=1e-5,
                                 dtype=jnp.float32):
    """Deterministic init matching VarianceEncoder.__init__."""
    init_val = math.log(math.exp(init - eps) - 1.0)
    b_shape = shape
    if channelwise:
        if len(shape) == 4:
            b_shape = (1, shape[1], 1, 1)
        elif len(shape) == 3:
            b_shape = (1, 1, shape[2])
        else:
            raise ValueError()
    return jnp.full(b_shape, init_val, dtype=dtype)


# --------------------------------- main ----------------------------------- #
if __name__ == "__main__":
    key = jax.random.PRNGKey(0)

    # Feature-map shape as the PyTorch module would see it (NCHW).
    N, C, H, W = 2, 4, 16, 16
    shape = (N, C, H, W)
    eps = 1e-5
    init = 0.1

    # Unused input x (mirrors the module's forward signature).
    x = jax.random.normal(key, shape, dtype=jnp.float32)

    b = make_variance_encoder_params(shape, init=init, channelwise=True, eps=eps)

    out = variance_encoder_forward(x, b, eps=eps)
    out = jax.block_until_ready(out)

    # Sanity checks against the closed-form reference (small b -> no threshold).
    assert out.shape == (1, C, 1, 1), out.shape
    ref = jnp.log1p(jnp.exp(b)) + eps
    assert jnp.allclose(out, ref, atol=1e-6), (out, ref)
    # softplus(log(exp(init-eps)-1)) + eps == init
    assert jnp.allclose(out, jnp.full_like(out, init), atol=1e-5), out

    # Also exercise the 3-D channelwise branch (shape (1,1,C2)).
    C2 = 32
    b3 = make_variance_encoder_params((2, 8, C2), init=init, channelwise=True, eps=eps)
    out3 = jax.block_until_ready(variance_encoder_forward(None, b3, eps=eps))
    assert out3.shape == (1, 1, C2), out3.shape
    assert jnp.allclose(out3, jnp.log1p(jnp.exp(b3)) + eps, atol=1e-6)

    # Large-value path exercises the threshold=20 branch through the kernel.
    b_big = jnp.full((1, C, 1, 1), 30.0, dtype=jnp.float32)
    out_big = jax.block_until_ready(variance_encoder_forward(None, b_big, eps=eps))
    assert jnp.allclose(out_big, b_big + eps, atol=1e-6), out_big

    print("KERNEL_OK")
</pallas_src>

<mosaic_0001>
module attributes {stable_mosaic.version = 11 : i64} {
  func.func @_softplus_kernel(%arg0: memref<8x128xf32, #tpu.memory_space<vmem>>, %arg1: memref<8x128xf32, #tpu.memory_space<vmem>>) attributes {dimension_semantics = [], scalar_prefetch = 0 : i64, scratch_operands = 0 : i64, tpu.core_type = #tpu.core_type<tc>} {
    %c0 = arith.constant 0 : index
    %c0_0 = arith.constant 0 : index
    %0 = vector.load %arg0[%c0, %c0_0] : memref<8x128xf32, #tpu.memory_space<vmem>>, vector<8x128xf32>
    %cst = arith.constant 2.000000e+01 : f32
    %1 = vector.broadcast %cst : f32 to vector<8x128xf32>
    %2 = arith.minimumf %0, %1 : vector<8x128xf32>
    %cst_1 = arith.constant 2.000000e+01 : f32
    %3 = vector.broadcast %cst_1 : f32 to vector<8x128xf32>
    %4 = arith.cmpf ogt, %0, %3 : vector<8x128xf32>
    %5 = math.exp %2 : vector<8x128xf32>
    %6 = math.log1p %5 : vector<8x128xf32>
    %7 = arith.select %4, %0, %6 : vector<8x128xi1>, vector<8x128xf32>
    %cst_2 = arith.constant 9.99999974E-6 : f32
    %8 = vector.broadcast %cst_2 : f32 to vector<8x128xf32>
    %9 = arith.addf %7, %8 : vector<8x128xf32>
    %c0_3 = arith.constant 0 : index
    %c0_4 = arith.constant 0 : index
    %10 = vector.load %arg1[%c0_3, %c0_4] : memref<8x128xf32, #tpu.memory_space<vmem>>, vector<8x128xf32>
    tpu.vector_store %arg1[%c0_3, %c0_4], %9 {strides = array<i32>} : memref<8x128xf32, #tpu.memory_space<vmem>>, vector<8x128xf32>,
    return
  }
}

</mosaic_0001>

<llo_original>
// kernel: _variance_encoder_core.1
$region0: #{_variance_encoder_core.1}
  #allocation0 [shape = 'u32[]', space=smem, size = 0x4, offset = 0x4, fixed_abs, tag = 'smem constant byte address 0x4 - core index']
  #allocation1 [shape = 'u32[72,128]{1,0:T(1,128)}', space=vmem, size = 0x9000, scoped, tag = 'internal scratch']
  %s0 = inlined_call_operand.vmem [shape: f32[8,128], index: 0, kind: input, shape index: {}]
  %s1 = inlined_call_operand.vmem [shape: f32[8,128], index: 1, kind: output, shape index: {}]
  %s2 = sld [smem:[#allocation0]]
  $region14: #{_variance_encoder_core.1} parent=0
    _
  %s4 = ssub.s32 1, %s2
  %s5 = scalar_select 0, %s4, %s2
  // Predicated region
  $region2: #{_variance_encoder_core.1} parent=0 // pred_check
    _
  $region3: #{_variance_encoder_core.1} parent=0 // pred_check_branch
    %7 = sbr.rel (0) target = $region5
  $region4: #{_variance_encoder_core.1} parent=0 // pred_region
    _
  $region5: #{_variance_encoder_core.1} parent=0 // pred_fallthru
    _
  %v8 = vld [vmem:[%s0] sm:$0xff]
  %v9 = vmin.f32 %v8, 20.0
  %vm10 = vcmp.gt.f32.partialorder %v8, 20.0
  %v11 = vmul.f32 %v9, 1.442695
  %v12 = vpow.pop %v11
  %v13 = vadd.f32 %v12, 1.0
  %v14 = vlog2.pop %v13
  %v15 = vmul.f32 %v14, 0.6931472
  %v16 = vmul.f32 -0.5, %v12
  %v17 = vadd.f32 %v16, 1.0
  %v18 = vmul.f32 %v17, %v12
  %v19 = vand.u32 2147483647, %v12
  %vm20 = vcmp.lt.f32.partialorder %v19, 0.0004427343
  %v21 = vsel %vm20, %v18, %v15
  %v22 = vsel %vm10, %v8, %v21
  %v23 = vadd.f32 %v22, 1e-05
  %24 = vst [vmem:[%s1] sm:$0xff] %v23
  // Predicated region
  $region6: #{_variance_encoder_core.1} parent=0 // pred_check
    _
  $region7: #{_variance_encoder_core.1} parent=0 // pred_check_branch
    %26 = sbr.rel (0) target = $region9
  $region8: #{_variance_encoder_core.1} parent=0 // pred_region
    _
  $region9: #{_variance_encoder_core.1} parent=0 // pred_fallthru
    _
  // Predicated region
  $region10: #{_variance_encoder_core.1} parent=0 // pred_check
    _
  $region11: #{_variance_encoder_core.1} parent=0 // pred_check_branch
    %28 = sbr.rel (0) target = $region13
  $region12: #{_variance_encoder_core.1} parent=0 // pred_region
    _
  $region13: #{_variance_encoder_core.1} parent=0 // pred_fallthru
    _

</llo_original>
